<compile_context>
chip_gen: v6e
topology: v6e:2x2x1
jax: 0.10.0
libtpu: 0.0.40
codegen_flags: <defaults>
</compile_context>

<pallas_src>
import functools

import jax
import jax.numpy as jnp
from jax.experimental import pallas as pl
from jax.experimental.pallas import tpu as pltpu

LN_EPS = 1e-5  # PyTorch nn.LayerNorm default


def _layernorm(x, gamma, beta):
    # Single-pass mean/variance: one read -> sum and sum-of-squares.
    inv_n = 1.0 / x.shape[-1]
    s = jnp.sum(x, axis=-1, keepdims=True)
    ss = jnp.sum(x * x, axis=-1, keepdims=True)
    mean = s * inv_n
    var = ss * inv_n - mean * mean
    inv = jax.lax.rsqrt(var + LN_EPS)
    return (x - mean) * inv * gamma + beta


def qnetwork_kernel(x_ref, w1_ref, w2_ref, wva_ref, wout_ref, vecs_ref,
                    bout_ref, out_ref, *, action_size):
    f32 = jnp.float32
    bf16 = jnp.bfloat16

    x = x_ref[...]
    vecs = vecs_ref[...]                       # [8, H] f32 packed vectors
    b1, g1, be1 = vecs[0:1], vecs[1:2], vecs[2:3]
    b2, g2, be2 = vecs[3:4], vecs[4:5], vecs[5:6]
    b_va = vecs[6:7]

    # ---- feature: Linear -> LayerNorm -> ReLU -> Dropout(eval=id)
    #              -> Linear -> LayerNorm -> ReLU
    h = jnp.dot(x.astype(bf16), w1_ref[...], preferred_element_type=f32) + b1
    h = jnp.maximum(_layernorm(h, g1, be1), 0.0)
    # TODO(synk): training-mode stochastic Dropout(0.2) (pltpu.prng_*) not implemented.
    h = jnp.dot(h.astype(bf16), w2_ref[...], preferred_element_type=f32) + b2
    feat = jnp.maximum(_layernorm(h, g2, be2), 0.0)

    # ---- fused value/advantage hidden layer: one [tb,H] x [H,H] matmul
    va = jnp.dot(feat.astype(bf16), wva_ref[...], preferred_element_type=f32) + b_va
    va = jnp.maximum(va, 0.0)

    # ---- fused, lane-padded output layer: col 0 = V, cols 1..A = advantage.
    out = jnp.dot(va.astype(bf16), wout_ref[...], preferred_element_type=f32)
    out = out + bout_ref[...]

    value = out[:, 0:1]                                        # [tb, 1]
    adv_sum = jnp.sum(out, axis=-1, keepdims=True) - value     # padded cols are 0
    adv_mean = adv_sum * (1.0 / action_size)
    # Lane-dense full-width store; cols 1..A hold Q = V + (A - mean(A)).
    out_ref[...] = value + out - adv_mean


def _round_up(x, m):
    return (x + m - 1) // m * m


def _pick_batch_tile(batch):
    # Largest 8-aligned tile (<=1024) that divides B with >=2 grid steps so the
    # "parallel" batch axis can shard across v7x's two TensorCores.
    for tb in (1024, 512, 256, 128, 64, 32, 16, 8):
        if tb < batch and batch % tb == 0:
            return tb
    return batch


def pack_params(params):
    """Fuse/pack the PyTorch-style parameter dict for the Pallas kernel."""
    H = params["w1"].shape[1]
    A = params["wa2"].shape[1]
    h2 = params["wv1"].shape[1]
    P = _round_up(1 + A, 128)          # lane-dense output width
    f32, bf16 = jnp.float32, jnp.bfloat16

    # Fused value/advantage hidden layer.
    w_va = jnp.concatenate([params["wv1"], params["wa1"]], axis=1)   # [H, H]
    b_va = jnp.concatenate([params["bv1"], params["ba1"]], axis=1)   # [1, H]

    # Fused, lane-padded output layer (col 0 <- value incl. bv2, cols 1..A <- advantage).
    w_out = jnp.zeros((H, P), f32)
    w_out = w_out.at[:h2, 0:1].set(params["wv2"])
    w_out = w_out.at[h2:, 1:1 + A].set(params["wa2"])
    b_out = jnp.zeros((1, P), f32)
    b_out = b_out.at[:, 0:1].set(params["bv2"])
    b_out = b_out.at[:, 1:1 + A].set(params["ba2"])

    # All H-wide vectors packed into one [8, H] operand.
    vecs = jnp.concatenate(
        [params["b1"], params["g1"], params["be1"],
         params["b2"], params["g2"], params["be2"],
         b_va, jnp.zeros((1, H), f32)], axis=0).astype(f32)

    return {
        "w1": params["w1"].astype(bf16),
        "w2": params["w2"].astype(bf16),
        "w_va": w_va.astype(bf16),
        "w_out": w_out.astype(bf16),
        "vecs": vecs,
        "b_out": b_out,
        "action_size": A,
        "out_pad": P,
    }


def qnetwork_forward(state, params, *, batch_tile=None):
    packed = pack_params(params)
    B, S = state.shape
    H = packed["w1"].shape[1]
    A = packed["action_size"]
    P = packed["out_pad"]

    tb = batch_tile or _pick_batch_tile(B)
    assert B % tb == 0, "batch must be divisible by the batch tile"

    def const_spec(shape):
        # Full (untiled) parameter block, same at every grid step.
        return pl.BlockSpec(shape, lambda i: (0,) * len(shape))

    grid = (B // tb,)
    in_specs = [
        pl.BlockSpec((tb, S), lambda i: (i, 0)),       # state tile
        const_spec(packed["w1"].shape),
        const_spec(packed["w2"].shape),
        const_spec(packed["w_va"].shape),
        const_spec(packed["w_out"].shape),
        const_spec(packed["vecs"].shape),
        const_spec(packed["b_out"].shape),
    ]
    out_specs = pl.BlockSpec((tb, P), lambda i: (i, 0))

    flops = 2 * B * (S * H + H * H + H * H + H * P)
    bytes_accessed = int(
        state.size * state.dtype.itemsize
        + sum(packed[k].size * packed[k].dtype.itemsize
              for k in ("w1", "w2", "w_va", "w_out", "vecs", "b_out"))
        + B * P * 4)

    q_padded = pl.pallas_call(
        functools.partial(qnetwork_kernel, action_size=A),
        out_shape=jax.ShapeDtypeStruct((B, P), jnp.float32),
        grid_spec=pltpu.PrefetchScalarGridSpec(
            num_scalar_prefetch=0,
            grid=grid,
            in_specs=in_specs,
            out_specs=out_specs,
        ),
        compiler_params=pltpu.CompilerParams(
            dimension_semantics=("parallel",),
        ),
        cost_estimate=pl.CostEstimate(
            flops=flops,
            transcendentals=2 * B,   # one rsqrt per row per LayerNorm
            bytes_accessed=bytes_accessed,
        ),
    )(
        state,
        packed["w1"], packed["w2"], packed["w_va"], packed["w_out"],
        packed["vecs"], packed["b_out"],
    )
    # Q-values live in lane-padded columns [1, 1+A); slice off the padding.
    return q_padded[:, 1:1 + A]


def xavier_uniform(key, fan_in, fan_out):
    bound = (6.0 / (fan_in + fan_out)) ** 0.5
    # Stored as [in, out]; kernel computes x @ W (== PyTorch x @ W.T).
    return jax.random.uniform(
        key, (fan_in, fan_out), dtype=jnp.float32, minval=-bound, maxval=bound)


def init_params(key, state_size, action_size, hidden_size):
    h2 = hidden_size // 2
    ks = jax.random.split(key, 6)
    z = lambda n: jnp.zeros((1, n), jnp.float32)
    o = lambda n: jnp.ones((1, n), jnp.float32)
    return {
        # feature
        "w1": xavier_uniform(ks[0], state_size, hidden_size), "b1": z(hidden_size),
        "g1": o(hidden_size), "be1": z(hidden_size),
        "w2": xavier_uniform(ks[1], hidden_size, hidden_size), "b2": z(hidden_size),
        "g2": o(hidden_size), "be2": z(hidden_size),
        # value stream
        "wv1": xavier_uniform(ks[2], hidden_size, h2), "bv1": z(h2),
        "wv2": xavier_uniform(ks[3], h2, 1), "bv2": z(1),
        # advantage stream
        "wa1": xavier_uniform(ks[4], hidden_size, h2), "ba1": z(h2),
        "wa2": xavier_uniform(ks[5], h2, action_size), "ba2": z(action_size),
    }


def reference_forward(state, p):
    def ln(x, g, b):
        m = jnp.mean(x, -1, keepdims=True)
        v = jnp.mean((x - m) ** 2, -1, keepdims=True)
        return (x - m) / jnp.sqrt(v + LN_EPS) * g + b

    h = jnp.maximum(ln(state @ p["w1"] + p["b1"], p["g1"], p["be1"]), 0.0)
    feat = jnp.maximum(ln(h @ p["w2"] + p["b2"], p["g2"], p["be2"]), 0.0)
    val = jnp.maximum(feat @ p["wv1"] + p["bv1"], 0.0) @ p["wv2"] + p["bv2"]
    adv = jnp.maximum(feat @ p["wa1"] + p["ba1"], 0.0) @ p["wa2"] + p["ba2"]
    return val + (adv - jnp.mean(adv, axis=1, keepdims=True))


if __name__ == "__main__":
    STATE_SIZE = 16
    ACTION_SIZE = 4
    HIDDEN = 32
    BATCH = 8

    key = jax.random.PRNGKey(0)
    k_params, k_state, k_noise = jax.random.split(key, 3)
    params = init_params(k_params, STATE_SIZE, ACTION_SIZE, HIDDEN)

    # Perturb biases / LayerNorm affine params away from their trivial init so
    # the correctness check exercises every term (including bv2).
    noise_keys = jax.random.split(k_noise, len(params))
    for nk, name in zip(noise_keys, sorted(params)):
        if name.startswith(("b", "g")):
            params[name] = params[name] + 0.1 * jax.random.normal(
                nk, params[name].shape, dtype=jnp.float32)

    state = jax.random.normal(k_state, (BATCH, STATE_SIZE), dtype=jnp.float32)

    q = qnetwork_forward(state, params)
    q = jax.block_until_ready(q)

    q_ref = reference_forward(state, params)
    assert q.shape == (BATCH, ACTION_SIZE)
    # bf16 matmuls vs f32 reference -> modest tolerance.
    max_err = jnp.max(jnp.abs(q - q_ref))
    assert jnp.allclose(q, q_ref, atol=1e-1, rtol=1e-1), f"max|diff|={max_err}"

    print("KERNEL_OK")
</pallas_src>

<mosaic_0001>
module attributes {stable_mosaic.version = 11 : i64} {
  func.func @qnetwork_kernel(%arg0: i32, %arg1: memref<8x16xf32, #tpu.memory_space<vmem>>, %arg2: memref<16x32xbf16, #tpu.memory_space<vmem>>, %arg3: memref<32x32xbf16, #tpu.memory_space<vmem>>, %arg4: memref<32x32xbf16, #tpu.memory_space<vmem>>, %arg5: memref<32x128xbf16, #tpu.memory_space<vmem>>, %arg6: memref<8x32xf32, #tpu.memory_space<vmem>>, %arg7: memref<1x128xf32, #tpu.memory_space<vmem>>, %arg8: memref<8x128xf32, #tpu.memory_space<vmem>>) attributes {dimension_semantics = [#tpu.dimension_semantics<parallel>], iteration_bounds = array<i64: 1>, scalar_prefetch = 0 : i64, scratch_operands = 0 : i64, tpu.core_type = #tpu.core_type<tc>, window_params = [{transform_indices = @transform_0, window_bounds = array<i64: 8, 16>}, {pipeline_mode = #tpu.pipeline_mode<synchronous>, transform_indices = @transform_1, window_bounds = array<i64: 16, 32>}, {pipeline_mode = #tpu.pipeline_mode<synchronous>, transform_indices = @transform_2, window_bounds = array<i64: 32, 32>}, {pipeline_mode = #tpu.pipeline_mode<synchronous>, transform_indices = @transform_3, window_bounds = array<i64: 32, 32>}, {pipeline_mode = #tpu.pipeline_mode<synchronous>, transform_indices = @transform_4, window_bounds = array<i64: 32, 128>}, {pipeline_mode = #tpu.pipeline_mode<synchronous>, transform_indices = @transform_5, window_bounds = array<i64: 8, 32>}, {pipeline_mode = #tpu.pipeline_mode<synchronous>, transform_indices = @transform_6, window_bounds = array<i64: 1, 128>}, {transform_indices = @transform_7, window_bounds = array<i64: 8, 128>}]} {
    %c0 = arith.constant 0 : index
    %c0_0 = arith.constant 0 : index
    %0 = vector.load %arg1[%c0, %c0_0] : memref<8x16xf32, #tpu.memory_space<vmem>>, vector<8x16xf32>
    %c0_1 = arith.constant 0 : index
    %c0_2 = arith.constant 0 : index
    %1 = vector.load %arg6[%c0_1, %c0_2] : memref<8x32xf32, #tpu.memory_space<vmem>>, vector<8x32xf32>
    %2 = vector.extract_strided_slice %1 {offsets = [0, 0], sizes = [1, 32], strides = [1, 1]} : vector<8x32xf32> to vector<1x32xf32>
    %3 = vector.extract_strided_slice %1 {offsets = [1, 0], sizes = [1, 32], strides = [1, 1]} : vector<8x32xf32> to vector<1x32xf32>
    %4 = vector.extract_strided_slice %1 {offsets = [2, 0], sizes = [1, 32], strides = [1, 1]} : vector<8x32xf32> to vector<1x32xf32>
    %5 = vector.extract_strided_slice %1 {offsets = [3, 0], sizes = [1, 32], strides = [1, 1]} : vector<8x32xf32> to vector<1x32xf32>
    %6 = vector.extract_strided_slice %1 {offsets = [4, 0], sizes = [1, 32], strides = [1, 1]} : vector<8x32xf32> to vector<1x32xf32>
    %7 = vector.extract_strided_slice %1 {offsets = [5, 0], sizes = [1, 32], strides = [1, 1]} : vector<8x32xf32> to vector<1x32xf32>
    %8 = vector.extract_strided_slice %1 {offsets = [6, 0], sizes = [1, 32], strides = [1, 1]} : vector<8x32xf32> to vector<1x32xf32>
    %9 = arith.truncf %0 : vector<8x16xf32> to vector<8x16xbf16>
    %c0_3 = arith.constant 0 : index
    %c0_4 = arith.constant 0 : index
    %10 = vector.load %arg2[%c0_3, %c0_4] : memref<16x32xbf16, #tpu.memory_space<vmem>>, vector<16x32xbf16>
    %cst = arith.constant dense<0.000000e+00> : vector<8x32xf32>
    %11 = tpu.matmul %9, %10, %cst {dimension_numbers = #tpu.dot_dimension_numbers<[1], [0], [0], [1], [0, 0, 1, 1], [], []>} : vector<8x16xbf16>, vector<16x32xbf16>, vector<8x32xf32> -> vector<8x32xf32>
    %12 = vector.broadcast %2 : vector<1x32xf32> to vector<8x32xf32>
    %13 = arith.addf %11, %12 : vector<8x32xf32>
    %cst_5 = arith.constant dense<0.000000e+00> : vector<8xf32>
    %14 = vector.multi_reduction <add>, %13, %cst_5 [1] : vector<8x32xf32> to vector<8xf32>
    %15 = vector.shape_cast %14 : vector<8xf32> to vector<8x1xf32>
    %16 = arith.mulf %13, %13 : vector<8x32xf32>
    %cst_6 = arith.constant dense<0.000000e+00> : vector<8xf32>
    %17 = vector.multi_reduction <add>, %16, %cst_6 [1] : vector<8x32xf32> to vector<8xf32>
    %18 = vector.shape_cast %17 : vector<8xf32> to vector<8x1xf32>
    %cst_7 = arith.constant 3.125000e-02 : f32
    %19 = vector.broadcast %cst_7 : f32 to vector<8x1xf32>
    %20 = arith.mulf %15, %19 : vector<8x1xf32>
    %cst_8 = arith.constant 3.125000e-02 : f32
    %21 = vector.broadcast %cst_8 : f32 to vector<8x1xf32>
    %22 = arith.mulf %18, %21 : vector<8x1xf32>
    %23 = arith.mulf %20, %20 : vector<8x1xf32>
    %24 = arith.subf %22, %23 : vector<8x1xf32>
    %cst_9 = arith.constant 9.99999974E-6 : f32
    %25 = vector.broadcast %cst_9 : f32 to vector<8x1xf32>
    %26 = arith.addf %24, %25 : vector<8x1xf32>
    %27 = math.rsqrt %26 : vector<8x1xf32>
    %28 = vector.broadcast %20 : vector<8x1xf32> to vector<8x32xf32>
    %29 = arith.subf %13, %28 : vector<8x32xf32>
    %30 = vector.broadcast %27 : vector<8x1xf32> to vector<8x32xf32>
    %31 = arith.mulf %29, %30 : vector<8x32xf32>
    %32 = vector.broadcast %3 : vector<1x32xf32> to vector<8x32xf32>
    %33 = arith.mulf %31, %32 : vector<8x32xf32>
    %34 = vector.broadcast %4 : vector<1x32xf32> to vector<8x32xf32>
    %35 = arith.addf %33, %34 : vector<8x32xf32>
    %cst_10 = arith.constant 0.000000e+00 : f32
    %36 = vector.broadcast %cst_10 : f32 to vector<8x32xf32>
    %37 = arith.maximumf %35, %36 : vector<8x32xf32>
    %38 = arith.truncf %37 : vector<8x32xf32> to vector<8x32xbf16>
    %c0_11 = arith.constant 0 : index
    %c0_12 = arith.constant 0 : index
    %39 = vector.load %arg3[%c0_11, %c0_12] : memref<32x32xbf16, #tpu.memory_space<vmem>>, vector<32x32xbf16>
    %cst_13 = arith.constant dense<0.000000e+00> : vector<8x32xf32>
    %40 = tpu.matmul %38, %39, %cst_13 {dimension_numbers = #tpu.dot_dimension_numbers<[1], [0], [0], [1], [0, 0, 1, 1], [], []>} : vector<8x32xbf16>, vector<32x32xbf16>, vector<8x32xf32> -> vector<8x32xf32>
    %41 = vector.broadcast %5 : vector<1x32xf32> to vector<8x32xf32>
    %42 = arith.addf %40, %41 : vector<8x32xf32>
    %cst_14 = arith.constant dense<0.000000e+00> : vector<8xf32>
    %43 = vector.multi_reduction <add>, %42, %cst_14 [1] : vector<8x32xf32> to vector<8xf32>
    %44 = vector.shape_cast %43 : vector<8xf32> to vector<8x1xf32>
    %45 = arith.mulf %42, %42 : vector<8x32xf32>
    %cst_15 = arith.constant dense<0.000000e+00> : vector<8xf32>
    %46 = vector.multi_reduction <add>, %45, %cst_15 [1] : vector<8x32xf32> to vector<8xf32>
    %47 = vector.shape_cast %46 : vector<8xf32> to vector<8x1xf32>
    %cst_16 = arith.constant 3.125000e-02 : f32
    %48 = vector.broadcast %cst_16 : f32 to vector<8x1xf32>
    %49 = arith.mulf %44, %48 : vector<8x1xf32>
    %cst_17 = arith.constant 3.125000e-02 : f32
    %50 = vector.broadcast %cst_17 : f32 to vector<8x1xf32>
    %51 = arith.mulf %47, %50 : vector<8x1xf32>
    %52 = arith.mulf %49, %49 : vector<8x1xf32>
    %53 = arith.subf %51, %52 : vector<8x1xf32>
    %cst_18 = arith.constant 9.99999974E-6 : f32
    %54 = vector.broadcast %cst_18 : f32 to vector<8x1xf32>
    %55 = arith.addf %53, %54 : vector<8x1xf32>
    %56 = math.rsqrt %55 : vector<8x1xf32>
    %57 = vector.broadcast %49 : vector<8x1xf32> to vector<8x32xf32>
    %58 = arith.subf %42, %57 : vector<8x32xf32>
    %59 = vector.broadcast %56 : vector<8x1xf32> to vector<8x32xf32>
    %60 = arith.mulf %58, %59 : vector<8x32xf32>
    %61 = vector.broadcast %6 : vector<1x32xf32> to vector<8x32xf32>
    %62 = arith.mulf %60, %61 : vector<8x32xf32>
    %63 = vector.broadcast %7 : vector<1x32xf32> to vector<8x32xf32>
    %64 = arith.addf %62, %63 : vector<8x32xf32>
    %cst_19 = arith.constant 0.000000e+00 : f32
    %65 = vector.broadcast %cst_19 : f32 to vector<8x32xf32>
    %66 = arith.maximumf %64, %65 : vector<8x32xf32>
    %67 = arith.truncf %66 : vector<8x32xf32> to vector<8x32xbf16>
    %c0_20 = arith.constant 0 : index
    %c0_21 = arith.constant 0 : index
    %68 = vector.load %arg4[%c0_20, %c0_21] : memref<32x32xbf16, #tpu.memory_space<vmem>>, vector<32x32xbf16>
    %cst_22 = arith.constant dense<0.000000e+00> : vector<8x32xf32>
    %69 = tpu.matmul %67, %68, %cst_22 {dimension_numbers = #tpu.dot_dimension_numbers<[1], [0], [0], [1], [0, 0, 1, 1], [], []>} : vector<8x32xbf16>, vector<32x32xbf16>, vector<8x32xf32> -> vector<8x32xf32>
    %70 = vector.broadcast %8 : vector<1x32xf32> to vector<8x32xf32>
    %71 = arith.addf %69, %70 : vector<8x32xf32>
    %cst_23 = arith.constant 0.000000e+00 : f32
    %72 = vector.broadcast %cst_23 : f32 to vector<8x32xf32>
    %73 = arith.maximumf %71, %72 : vector<8x32xf32>
    %74 = arith.truncf %73 : vector<8x32xf32> to vector<8x32xbf16>
    %c0_24 = arith.constant 0 : index
    %c0_25 = arith.constant 0 : index
    %75 = vector.load %arg5[%c0_24, %c0_25] : memref<32x128xbf16, #tpu.memory_space<vmem>>, vector<32x128xbf16>
    %cst_26 = arith.constant dense<0.000000e+00> : vector<8x128xf32>
    %76 = tpu.matmul %74, %75, %cst_26 {dimension_numbers = #tpu.dot_dimension_numbers<[1], [0], [0], [1], [0, 0, 1, 1], [], []>} : vector<8x32xbf16>, vector<32x128xbf16>, vector<8x128xf32> -> vector<8x128xf32>
    %c0_27 = arith.constant 0 : index
    %c0_28 = arith.constant 0 : index
    %77 = vector.load %arg7[%c0_27, %c0_28] : memref<1x128xf32, #tpu.memory_space<vmem>>, vector<1x128xf32>
    %78 = vector.broadcast %77 : vector<1x128xf32> to vector<8x128xf32>
    %79 = arith.addf %76, %78 : vector<8x128xf32>
    %80 = vector.extract_strided_slice %79 {offsets = [0, 0], sizes = [8, 1], strides = [1, 1]} : vector<8x128xf32> to vector<8x1xf32>
    %cst_29 = arith.constant dense<0.000000e+00> : vector<8xf32>
    %81 = vector.multi_reduction <add>, %79, %cst_29 [1] : vector<8x128xf32> to vector<8xf32>
    %82 = vector.shape_cast %81 : vector<8xf32> to vector<8x1xf32>
    %83 = arith.subf %82, %80 : vector<8x1xf32>
    %cst_30 = arith.constant 2.500000e-01 : f32
    %84 = vector.broadcast %cst_30 : f32 to vector<8x1xf32>
    %85 = arith.mulf %83, %84 : vector<8x1xf32>
    %86 = vector.broadcast %80 : vector<8x1xf32> to vector<8x128xf32>
    %87 = arith.addf %86, %79 : vector<8x128xf32>
    %88 = vector.broadcast %85 : vector<8x1xf32> to vector<8x128xf32>
    %89 = arith.subf %87, %88 : vector<8x128xf32>
    %c0_31 = arith.constant 0 : index
    %c0_32 = arith.constant 0 : index
    %90 = vector.load %arg8[%c0_31, %c0_32] : memref<8x128xf32, #tpu.memory_space<vmem>>, vector<8x128xf32>
    tpu.vector_store %arg8[%c0_31, %c0_32], %89 {strides = array<i32>} : memref<8x128xf32, #tpu.memory_space<vmem>>, vector<8x128xf32>,
    return
  }
  func.func @transform_0(%arg0: i32) -> (i32, i32) {
    %c0_i32 = arith.constant 0 : i32
    %c0_i32_0 = arith.constant 0 : i32
    return %arg0, %c0_i32 : i32, i32
  }
  func.func @transform_1(%arg0: i32) -> (i32, i32) {
    %c0_i32 = arith.constant 0 : i32
    %c0_i32_0 = arith.constant 0 : i32
    %c0_i32_1 = arith.constant 0 : i32
    return %c0_i32, %c0_i32_0 : i32, i32
  }
  func.func @transform_2(%arg0: i32) -> (i32, i32) {
    %c0_i32 = arith.constant 0 : i32
    %c0_i32_0 = arith.constant 0 : i32
    %c0_i32_1 = arith.constant 0 : i32
    return %c0_i32, %c0_i32_0 : i32, i32
  }
  func.func @transform_3(%arg0: i32) -> (i32, i32) {
    %c0_i32 = arith.constant 0 : i32
    %c0_i32_0 = arith.constant 0 : i32
    %c0_i32_1 = arith.constant 0 : i32
    return %c0_i32, %c0_i32_0 : i32, i32
  }
  func.func @transform_4(%arg0: i32) -> (i32, i32) {
    %c0_i32 = arith.constant 0 : i32
    %c0_i32_0 = arith.constant 0 : i32
    %c0_i32_1 = arith.constant 0 : i32
    return %c0_i32, %c0_i32_0 : i32, i32
  }
  func.func @transform_5(%arg0: i32) -> (i32, i32) {
    %c0_i32 = arith.constant 0 : i32
    %c0_i32_0 = arith.constant 0 : i32
    %c0_i32_1 = arith.constant 0 : i32
    return %c0_i32, %c0_i32_0 : i32, i32
  }
  func.func @transform_6(%arg0: i32) -> (i32, i32) {
    %c0_i32 = arith.constant 0 : i32
    %c0_i32_0 = arith.constant 0 : i32
    %c0_i32_1 = arith.constant 0 : i32
    return %c0_i32, %c0_i32_0 : i32, i32
  }
  func.func @transform_7(%arg0: i32) -> (i32, i32) {
    %c0_i32 = arith.constant 0 : i32
    %c0_i32_0 = arith.constant 0 : i32
    return %arg0, %c0_i32 : i32, i32
  }
}

</mosaic_0001>

<llo_original>
// kernel: tpu_custom_call.1
$region0: #{tpu_custom_call.1}
  #allocation0 [shape = 'u32[]', space=smem, size = 0x4, offset = 0x4, fixed_abs, tag = 'smem constant byte address 0x4 - core index']
  #allocation1 [shape = 'u32[144,128]{1,0:T(1,128)}', space=vmem, size = 0x12000, scoped, tag = 'internal scratch']
  %s0 = inlined_call_operand.hbm [shape: f32[8,16], index: 0, kind: input, shape index: {}]
  %s1 = inlined_call_operand.hbm [shape: bf16[16,32], index: 1, kind: input, shape index: {}]
  %s2 = inlined_call_operand.hbm [shape: bf16[32,32], index: 2, kind: input, shape index: {}]
  %s3 = inlined_call_operand.hbm [shape: bf16[32,32], index: 3, kind: input, shape index: {}]
  %s4 = inlined_call_operand.hbm [shape: bf16[32,128], index: 4, kind: input, shape index: {}]
  %s5 = inlined_call_operand.vmem [shape: f32[8,32], index: 5, kind: input, shape index: {}]
  %s6 = inlined_call_operand.vmem [shape: f32[1,128], index: 6, kind: input, shape index: {}]
  %s7 = inlined_call_operand.hbm [shape: f32[8,128], index: 7, kind: output, shape index: {}]
  %s8 = sld [smem:[#allocation0]]
  $region58: #{tpu_custom_call.1} parent=0
    _
  %s10 = ssub.s32 1, %s8
  %s11 = scalar_select 0, %s10, %s8
  $region1: #{tpu_custom_call.1} parent=0
    #allocation2 [shape = 'u8[4096]{0}', space=vmem, size = 0x1000, scoped, tag = 'input window, operand 0, single buffered']
    #allocation3 [shape = 's32[1]{0}', space=sflag, size = 0x4, scoped, tag = 'scoped memory for tpu_custom_call.1']
    #allocation4 [shape = 's32[1]{0}', space=sflag, size = 0x4, scoped, tag = 'scoped memory for tpu_custom_call.1']
    #allocation5 [shape = 'u8[4096]{0}', space=vmem, size = 0x1000, scoped, tag = 'input window, operand 1, single buffered']
    #allocation6 [shape = 's32[1]{0}', space=sflag, size = 0x4, scoped, tag = 'scoped memory for tpu_custom_call.1']
    #allocation7 [shape = 'u8[8192]{0}', space=vmem, size = 0x2000, scoped, tag = 'input window, operand 2, single buffered']
    #allocation8 [shape = 'u8[8192]{0}', space=vmem, size = 0x2000, scoped, tag = 'input window, operand 3, single buffered']
    #allocation9 [shape = 's32[1]{0}', space=sflag, size = 0x4, scoped, tag = 'scoped memory for tpu_custom_call.1']
    #allocation10 [shape = 'u8[8192]{0}', space=vmem, size = 0x2000, scoped, tag = 'input window, operand 4, single buffered']
    #allocation11 [shape = 'u8[4096]{0}', space=vmem, size = 0x1000, scoped, tag = 'output window, operand 0, single buffered']
    %12 = vsyncpa [#allocation3], 0
    %13 = vsyncpa [#allocation6], 0
    %14 = vsyncpa [#allocation9], 0
    %15 = vsyncpa [#allocation4], 0
    // Predicated region
    $region2: #{tpu_custom_call.1} parent=1 // pred_check
      _
    $region3: #{tpu_custom_call.1} parent=1 // pred_check_branch
      %17 = sbr.rel (0) target = $region5
    $region4: #{tpu_custom_call.1} parent=1 // pred_region
      %s19 = ssub.s32 128, 128
      %20 = vsyncadd [#allocation3], %s19
      %s22 = sshll.u32 [#allocation2], 4
      %s23 = int_to_ptr.vmem [resolvable:$true] %s22
      %25 = dma.hbm_to_vmem [thread:$0]  %s0, 128, %s23, [#allocation3]
    $region5: #{tpu_custom_call.1} parent=1 // pred_fallthru
      _
    // Predicated region
    $region6: #{tpu_custom_call.1} parent=1 // pred_check
      _
    $region7: #{tpu_custom_call.1} parent=1 // pred_check_branch
      %27 = sbr.rel (0) target = $region9
    $region8: #{tpu_custom_call.1} parent=1 // pred_region
      %s29 = ssub.s32 128, 128
      %30 = vsyncadd [#allocation6], %s29
      %s31 = sshll.u32 [#allocation5], 4
      %s32 = int_to_ptr.vmem [resolvable:$true] %s31
      %37 = dma.hbm_to_vmem [thread:$0]  %s1, 128, %s32, [#allocation6], 64, 64, 4
    $region9: #{tpu_custom_call.1} parent=1 // pred_fallthru
      _
    // Predicated region
    $region10: #{tpu_custom_call.1} parent=1 // pred_check
      _
    $region11: #{tpu_custom_call.1} parent=1 // pred_check_branch
      %39 = sbr.rel (0) target = $region13
    $region12: #{tpu_custom_call.1} parent=1 // pred_region
      %s41 = ssub.s32 256, 256
      %42 = vsyncadd [#allocation6], %s41
      %s43 = sshll.u32 [#allocation7], 4
      %s44 = int_to_ptr.vmem [resolvable:$true] %s43
      %49 = dma.hbm_to_vmem [thread:$0]  %s2, 256, %s44, [#allocation6], 64, 64, 4
    $region13: #{tpu_custom_call.1} parent=1 // pred_fallthru
      _
    // Predicated region
    $region14: #{tpu_custom_call.1} parent=1 // pred_check
      _
    $region15: #{tpu_custom_call.1} parent=1 // pred_check_branch
      %51 = sbr.rel (0) target = $region17
    $region16: #{tpu_custom_call.1} parent=1 // pred_region
      %s53 = ssub.s32 256, 256
      %54 = vsyncadd [#allocation9], %s53
      %s55 = sshll.u32 [#allocation8], 4
      %s56 = int_to_ptr.vmem [resolvable:$true] %s55
      %61 = dma.hbm_to_vmem [thread:$0]  %s3, 256, %s56, [#allocation9], 64, 64, 4
    $region17: #{tpu_custom_call.1} parent=1 // pred_fallthru
      _
    // Predicated region
    $region18: #{tpu_custom_call.1} parent=1 // pred_check
      _
    $region19: #{tpu_custom_call.1} parent=1 // pred_check_branch
      %63 = sbr.rel (0) target = $region21
    $region20: #{tpu_custom_call.1} parent=1 // pred_region
      %s65 = ssub.s32 256, 256
      %66 = vsyncadd [#allocation9], %s65
      %s67 = sshll.u32 [#allocation10], 4
      %s68 = int_to_ptr.vmem [resolvable:$true] %s67
      %73 = dma.hbm_to_vmem [thread:$0]  %s4, 256, %s68, [#allocation9], 64, 64, 4
    $region21: #{tpu_custom_call.1} parent=1 // pred_fallthru
      _
    // Predicated region
    $region22: #{tpu_custom_call.1} parent=1 // pred_check
      _
    $region23: #{tpu_custom_call.1} parent=1 // pred_check_branch
      %75 = sbr.rel (0) target = $region25
    $region24: #{tpu_custom_call.1} parent=1 // pred_region
      _
    $region25: #{tpu_custom_call.1} parent=1 // pred_fallthru
      _
    // Predicated region
    $region26: #{tpu_custom_call.1} parent=1 // pred_check
      _
    $region27: #{tpu_custom_call.1} parent=1 // pred_check_branch
      %77 = sbr.rel (0) target = $region29
    $region28: #{tpu_custom_call.1} parent=1 // pred_region
      _
    $region29: #{tpu_custom_call.1} parent=1 // pred_fallthru
      _
    // Predicated region
    $region30: #{tpu_custom_call.1} parent=1 // pred_check
      _
    $region31: #{tpu_custom_call.1} parent=1 // pred_check_branch
      %79 = sbr.rel (0) target = $region33
    $region32: #{tpu_custom_call.1} parent=1 // pred_region
      %80 = dma.done [#allocation3], 128
    $region33: #{tpu_custom_call.1} parent=1 // pred_fallthru
      _
    // Predicated region
    $region34: #{tpu_custom_call.1} parent=1 // pred_check
      _
    $region35: #{tpu_custom_call.1} parent=1 // pred_check_branch
      %82 = sbr.rel (0) target = $region37
    $region36: #{tpu_custom_call.1} parent=1 // pred_region
      %83 = dma.done [#allocation6], 128
    $region37: #{tpu_custom_call.1} parent=1 // pred_fallthru
      _
    // Predicated region
    $region38: #{tpu_custom_call.1} parent=1 // pred_check
      _
    $region39: #{tpu_custom_call.1} parent=1 // pred_check_branch
      %85 = sbr.rel (0) target = $region41
    $region40: #{tpu_custom_call.1} parent=1 // pred_region
      %86 = dma.done [#allocation6], 256
    $region41: #{tpu_custom_call.1} parent=1 // pred_fallthru
      _
    // Predicated region
    $region42: #{tpu_custom_call.1} parent=1 // pred_check
      _
    $region43: #{tpu_custom_call.1} parent=1 // pred_check_branch
      %88 = sbr.rel (0) target = $region45
    $region44: #{tpu_custom_call.1} parent=1 // pred_region
      %89 = dma.done [#allocation9], 256
    $region45: #{tpu_custom_call.1} parent=1 // pred_fallthru
      _
    // Predicated region
    $region46: #{tpu_custom_call.1} parent=1 // pred_check
      _
    $region47: #{tpu_custom_call.1} parent=1 // pred_check_branch
      %91 = sbr.rel (0) target = $region49
    $region48: #{tpu_custom_call.1} parent=1 // pred_region
      %92 = dma.done [#allocation9], 256
    $region49: #{tpu_custom_call.1} parent=1 // pred_fallthru
      _
    %v94 = vld [vmem:[#allocation2] sm:$0xff]
    %v95 = vld [vmem:[%s5] sm:$0xff]
    %v96 = vpack.c.bf16 %v94, %v94
    %v97 = vld [vmem:[#allocation5] sm:$0xf]
    %v98 = vld [vmem:[#allocation5 + $0x4] sm:$0xf]
    %v99 = vlaneseq
    %v100 = vshrl.u32 %v99, 7
    %v101 = vsub.s32 0, %v100
    %v102 = vrot.slane %v95, %v101
    %v105 = vunpack.c.l.b16 %v97
    %v106 = vunpack.c.l.b16 %v98
    %v107 = vpack.c.b16 %v106, %v105
    %vm109 = vcmask 130048
    %v111 = vsel %vm109, %v96, 0
    %113 = vmatprep.subr.bf16.mxu0 0
    %114 = vmatpush1.bf16.msra.mxu0 0
    %115 = vmatprep.subr.bf16.mxu0 0
    %116 = vmatpush1.bf16.msra.mxu0 0
    %117 = vmatprep.subr.bf16.mxu0 0
    %118 = vmatpush1.bf16.msra.mxu0 0
    %119 = vmatprep.subr.bf16.mxu0 0
    %120 = vmatpush1.bf16.msra.mxu0 0
    %121 = vmatprep.subr.bf16.mxu0 0
    %122 = vmatpush1.bf16.msra.mxu0 0
    %123 = vmatprep.subr.bf16.mxu0 0
    %124 = vmatpush1.bf16.msra.mxu0 0
    %125 = vmatprep.subr.bf16.mxu0 0
    %126 = vmatpush1.bf16.msra.mxu0 0
    %127 = vmatprep.subr.bf16.mxu0 0
    %128 = vmatpush1.bf16.msra.mxu0 %v107
    %129 = vmatprep.subr.bf16.mxu0 0
    %130 = vmatpush2.bf16.msra.mxu0 0
    %131 = vmatprep.subr.bf16.mxu0 0
    %132 = vmatpush2.bf16.msra.mxu0 0
    %133 = vmatprep.subr.bf16.mxu0 0
    %134 = vmatpush2.bf16.msra.mxu0 0
    %135 = vmatprep.subr.bf16.mxu0 0
    %136 = vmatpush2.bf16.msra.mxu0 0
    %137 = vmatprep.subr.bf16.mxu0 0
    %138 = vmatpush2.bf16.msra.mxu0 0
    %139 = vmatprep.subr.bf16.mxu0 0
    %140 = vmatpush2.bf16.msra.mxu0 0
    %141 = vmatprep.subr.bf16.mxu0 0
    %142 = vmatpush2.bf16.msra.mxu0 0
    %143 = vmatprep.subr.bf16.mxu0 0
    %144 = vmatpush2.bf16.msra.mxu0 0
    %145 = vmatprep.mubr.bf16.mxu0 0
    %146 = vmatmul.mubr.bf16.gmra.mxu0 %v111
    %v147 = vpop.f32.mrf.mxu0
    %v148 = vadd.f32 %v102, %v147
    %v149 = vpop.f32.mrf.mxu0
    %v150 = vpop.f32.mrf.mxu0
    %v151 = vpop.f32.mrf.mxu0
    %152 = vdwg.mxu0
    %vm153 = vcmask 261120
    %v154 = vsel %vm153, %v148, 0.0
    %155 = vadd.xlane.f32.xlu0 %v154
    %v156 = vpop.xlane.xlu0 %155
    %v157 = vmul.f32 %v148, %v148
    %v158 = vsel %vm153, %v157, 0.0
    %159 = vadd.xlane.f32.xlu0 %v158
    %v160 = vpop.xlane.xlu0 %159
    %v161 = vmul.f32 %v156, 0.03125
    %v162 = vmul.f32 %v160, 0.03125
    %v163 = vmul.f32 %v161, %v161
    %v164 = vsub.f32 %v162, %v163
    %v165 = vadd.f32 %v164, 1e-05
    %v166 = vrsqrt.pop %v165
    %v167 = vsub.f32 %v148, %v161
    %v168 = vmul.f32 %v167, %v166
    %v169 = vlaneseq
    %v170 = vshrl.u32 %v169, 7
    %v171 = vsub.s32 1, %v170
    %v172 = vrot.slane %v95, %v171
    %v173 = vmul.f32 %v168, %v172
    %v174 = vlaneseq
    %v175 = vshrl.u32 %v174, 7
    %v176 = vsub.s32 2, %v175
    %v177 = vrot.slane %v95, %v176
    %v178 = vadd.f32 %v173, %v177
    %v179 = vmax.f32 %v178, 0.0
    %v180 = vpack.c.bf16 %v179, %v179
    %v181 = vld [vmem:[#allocation7] sm:$0xf]
    %v182 = vld [vmem:[#allocation7 + $0x4] sm:$0xf]
    %v183 = vld [vmem:[#allocation7 + $0x8] sm:$0xf]
    %v184 = vld [vmem:[#allocation7 + $0xc] sm:$0xf]
    %v185 = vlaneseq
    %v186 = vshrl.u32 %v185, 7
    %v187 = vsub.s32 3, %v186
    %v188 = vrot.slane %v95, %v187
    %v193 = vunpack.c.l.b16 %v181
    %v194 = vunpack.c.l.b16 %v182
    %v195 = vunpack.c.l.b16 %v183
    %v196 = vunpack.c.l.b16 %v184
    %v197 = vpack.c.b16 %v194, %v193
    %v198 = vpack.c.b16 %v196, %v195
    %v202 = vsel %vm153, %v180, 0
    %204 = vmatprep.subr.bf16.mxu0 0
    %205 = vmatpush1.bf16.msra.mxu0 0
    %206 = vmatprep.subr.bf16.mxu0 0
    %207 = vmatpush1.bf16.msra.mxu0 0
    %208 = vmatprep.subr.bf16.mxu0 0
    %209 = vmatpush1.bf16.msra.mxu0 0
    %210 = vmatprep.subr.bf16.mxu0 0
    %211 = vmatpush1.bf16.msra.mxu0 0
    %212 = vmatprep.subr.bf16.mxu0 0
    %213 = vmatpush1.bf16.msra.mxu0 0
    %214 = vmatprep.subr.bf16.mxu0 0
    %215 = vmatpush1.bf16.msra.mxu0 0
    %216 = vmatprep.subr.bf16.mxu0 0
    %217 = vmatpush1.bf16.msra.mxu0 %v198
    %218 = vmatprep.subr.bf16.mxu0 0
    %219 = vmatpush1.bf16.msra.mxu0 %v197
    %220 = vmatprep.subr.bf16.mxu0 0
    %221 = vmatpush2.bf16.msra.mxu0 0
    %222 = vmatprep.subr.bf16.mxu0 0
    %223 = vmatpush2.bf16.msra.mxu0 0
    %224 = vmatprep.subr.bf16.mxu0 0
    %225 = vmatpush2.bf16.msra.mxu0 0
    %226 = vmatprep.subr.bf16.mxu0 0
    %227 = vmatpush2.bf16.msra.mxu0 0
    %228 = vmatprep.subr.bf16.mxu0 0
    %229 = vmatpush2.bf16.msra.mxu0 0
    %230 = vmatprep.subr.bf16.mxu0 0
    %231 = vmatpush2.bf16.msra.mxu0 0
    %232 = vmatprep.subr.bf16.mxu0 0
    %233 = vmatpush2.bf16.msra.mxu0 0
    %234 = vmatprep.subr.bf16.mxu0 0
    %235 = vmatpush2.bf16.msra.mxu0 0
    %236 = vmatprep.mubr.bf16.mxu0 0
    %237 = vmatmul.mubr.bf16.gmra.mxu0 %v202
    %v238 = vpop.f32.mrf.mxu0
    %v239 = vadd.f32 %v188, %v238
    %v240 = vpop.f32.mrf.mxu0
    %v241 = vpop.f32.mrf.mxu0
    %v242 = vpop.f32.mrf.mxu0
    %243 = vdwg.mxu0
    %v244 = vsel %vm153, %v239, 0.0
    %245 = vadd.xlane.f32.xlu0 %v244
    %v246 = vpop.xlane.xlu0 %245
    %v247 = vmul.f32 %v239, %v239
    %v248 = vsel %vm153, %v247, 0.0
    %249 = vadd.xlane.f32.xlu0 %v248
    %v250 = vpop.xlane.xlu0 %249
    %v251 = vmul.f32 %v246, 0.03125
    %v252 = vmul.f32 %v250, 0.03125
    %v253 = vmul.f32 %v251, %v251
    %v254 = vsub.f32 %v252, %v253
    %v255 = vadd.f32 %v254, 1e-05
    %v256 = vrsqrt.pop %v255
    %v257 = vsub.f32 %v239, %v251
    %v258 = vmul.f32 %v257, %v256
    %v259 = vlaneseq
    %v260 = vshrl.u32 %v259, 7
    %v261 = vsub.s32 4, %v260
    %v262 = vrot.slane %v95, %v261
    %v263 = vmul.f32 %v258, %v262
    %v264 = vlaneseq
    %v265 = vshrl.u32 %v264, 7
    %v266 = vsub.s32 5, %v265
    %v267 = vrot.slane %v95, %v266
    %v268 = vadd.f32 %v263, %v267
    %v269 = vmax.f32 %v268, 0.0
    %v270 = vpack.c.bf16 %v269, %v269
    %v271 = vld [vmem:[#allocation8] sm:$0xf]
    %v272 = vld [vmem:[#allocation8 + $0x4] sm:$0xf]
    %v273 = vld [vmem:[#allocation8 + $0x8] sm:$0xf]
    %v274 = vld [vmem:[#allocation8 + $0xc] sm:$0xf]
    %v275 = vlaneseq
    %v276 = vshrl.u32 %v275, 7
    %v277 = vsub.s32 6, %v276
    %v278 = vrot.slane %v95, %v277
    %v283 = vunpack.c.l.b16 %v271
    %v284 = vunpack.c.l.b16 %v272
    %v285 = vunpack.c.l.b16 %v273
    %v286 = vunpack.c.l.b16 %v274
    %v287 = vpack.c.b16 %v284, %v283
    %v288 = vpack.c.b16 %v286, %v285
    %v292 = vsel %vm153, %v270, 0
    %294 = vmatprep.subr.bf16.mxu0 0
    %295 = vmatpush1.bf16.msra.mxu0 0
    %296 = vmatprep.subr.bf16.mxu0 0
    %297 = vmatpush1.bf16.msra.mxu0 0
    %298 = vmatprep.subr.bf16.mxu0 0
    %299 = vmatpush1.bf16.msra.mxu0 0
    %300 = vmatprep.subr.bf16.mxu0 0
    %301 = vmatpush1.bf16.msra.mxu0 0
    %302 = vmatprep.subr.bf16.mxu0 0
    %303 = vmatpush1.bf16.msra.mxu0 0
    %304 = vmatprep.subr.bf16.mxu0 0
    %305 = vmatpush1.bf16.msra.mxu0 0
    %306 = vmatprep.subr.bf16.mxu0 0
    %307 = vmatpush1.bf16.msra.mxu0 %v288
    %308 = vmatprep.subr.bf16.mxu0 0
    %309 = vmatpush1.bf16.msra.mxu0 %v287
    %310 = vmatprep.subr.bf16.mxu0 0
    %311 = vmatpush2.bf16.msra.mxu0 0
    %312 = vmatprep.subr.bf16.mxu0 0
    %313 = vmatpush2.bf16.msra.mxu0 0
    %314 = vmatprep.subr.bf16.mxu0 0
    %315 = vmatpush2.bf16.msra.mxu0 0
    %316 = vmatprep.subr.bf16.mxu0 0
    %317 = vmatpush2.bf16.msra.mxu0 0
    %318 = vmatprep.subr.bf16.mxu0 0
    %319 = vmatpush2.bf16.msra.mxu0 0
    %320 = vmatprep.subr.bf16.mxu0 0
    %321 = vmatpush2.bf16.msra.mxu0 0
    %322 = vmatprep.subr.bf16.mxu0 0
    %323 = vmatpush2.bf16.msra.mxu0 0
    %324 = vmatprep.subr.bf16.mxu0 0
    %325 = vmatpush2.bf16.msra.mxu0 0
    %326 = vmatprep.mubr.bf16.mxu0 0
    %327 = vmatmul.mubr.bf16.gmra.mxu0 %v292
    %v328 = vpop.f32.mrf.mxu0
    %v329 = vadd.f32 %v278, %v328
    %v330 = vpop.f32.mrf.mxu0
    %v331 = vpop.f32.mrf.mxu0
    %v332 = vpop.f32.mrf.mxu0
    %333 = vdwg.mxu0
    %v334 = vmax.f32 %v329, 0.0
    %v335 = vpack.c.bf16 %v334, %v334
    %v336 = vld [vmem:[#allocation10] sm:$0xf]
    %v337 = vld [vmem:[#allocation10 + $0x4] sm:$0xf]
    %v338 = vld [vmem:[#allocation10 + $0x8] sm:$0xf]
    %v339 = vld [vmem:[#allocation10 + $0xc] sm:$0xf]
    %v340 = vld [vmem:[%s6] sm:$0x1]
    %v342 = vlaneseq
    %v343 = vshrl.u32 %v342, 7
    %v344 = vsub.s32 0, %v343
    %v345 = vrot.slane %v340, %v344
    %v351 = vunpack.c.l.b16 %v336
    %v352 = vunpack.c.l.b16 %v337
    %v353 = vunpack.c.l.b16 %v338
    %v354 = vunpack.c.l.b16 %v339
    %v355 = vpack.c.b16 %v352, %v351
    %v356 = vpack.c.b16 %v354, %v353
    %v360 = vsel %vm153, %v335, 0
    %362 = vmatprep.subr.bf16.mxu0 0
    %363 = vmatpush1.bf16.msra.mxu0 0
    %364 = vmatprep.subr.bf16.mxu0 0
    %365 = vmatpush1.bf16.msra.mxu0 0
    %366 = vmatprep.subr.bf16.mxu0 0
    %367 = vmatpush1.bf16.msra.mxu0 0
    %368 = vmatprep.subr.bf16.mxu0 0
    %369 = vmatpush1.bf16.msra.mxu0 0
    %370 = vmatprep.subr.bf16.mxu0 0
    %371 = vmatpush1.bf16.msra.mxu0 0
    %372 = vmatprep.subr.bf16.mxu0 0
    %373 = vmatpush1.bf16.msra.mxu0 0
    %374 = vmatprep.subr.bf16.mxu0 0
    %375 = vmatpush1.bf16.msra.mxu0 %v356
    %376 = vmatprep.subr.bf16.mxu0 0
    %377 = vmatpush1.bf16.msra.mxu0 %v355
    %378 = vmatprep.subr.bf16.mxu0 0
    %379 = vmatpush2.bf16.msra.mxu0 0
    %380 = vmatprep.subr.bf16.mxu0 0
    %381 = vmatpush2.bf16.msra.mxu0 0
    %382 = vmatprep.subr.bf16.mxu0 0
    %383 = vmatpush2.bf16.msra.mxu0 0
    %384 = vmatprep.subr.bf16.mxu0 0
    %385 = vmatpush2.bf16.msra.mxu0 0
    %386 = vmatprep.subr.bf16.mxu0 0
    %387 = vmatpush2.bf16.msra.mxu0 0
    %388 = vmatprep.subr.bf16.mxu0 0
    %389 = vmatpush2.bf16.msra.mxu0 0
    %390 = vmatprep.subr.bf16.mxu0 0
    %391 = vmatpush2.bf16.msra.mxu0 0
    %392 = vmatprep.subr.bf16.mxu0 0
    %393 = vmatpush2.bf16.msra.mxu0 0
    %394 = vmatprep.mubr.bf16.mxu0 0
    %395 = vmatmul.mubr.bf16.gmra.mxu0 %v360
    %v396 = vpop.f32.mrf.mxu0
    %v397 = vadd.f32 %v345, %v396
    %v398 = vpop.f32.mrf.mxu0
    %v399 = vpop.f32.mrf.mxu0
    %v400 = vpop.f32.mrf.mxu0
    %401 = vdwg.mxu0
    %402 = vadd.xlane.f32.xlu0 %v397
    %v403 = vpop.xlane.xlu0 %402
    %v404 = vsub.f32 %v403, %v397
    %v405 = vmul.f32 %v404, 0.25
    %407 = vset.pattern.permute.xlu0 0
    %408 = vperm.xlu0 %407, %v397
    %v409 = vpop.permute.xlu0 %408
    %v411 = vadd.f32 %v409, %v397
    %413 = vset.pattern.permute.xlu0 0
    %414 = vperm.xlu0 %413, %v405
    %v415 = vpop.permute.xlu0 %414
    %v417 = vsub.f32 %v411, %v415
    %418 = vst [vmem:[#allocation11] sm:$0xff] %v417
    // Predicated region
    $region50: #{tpu_custom_call.1} parent=1 // pred_check
      _
    $region51: #{tpu_custom_call.1} parent=1 // pred_check_branch
      %420 = sbr.rel (0) target = $region53
    $region52: #{tpu_custom_call.1} parent=1 // pred_region
      %s422 = ssub.s32 128, 128
      %423 = vsyncadd [#allocation4], %s422
      %s425 = sshll.u32 [#allocation11], 4
      %s426 = int_to_ptr.vmem [resolvable:$true] %s425
      %428 = dma.vmem_to_hbm [thread:$0]  %s426, 128, %s7, [#allocation4]
    $region53: #{tpu_custom_call.1} parent=1 // pred_fallthru
      _
    // Predicated region
    $region54: #{tpu_custom_call.1} parent=1 // pred_check
      _
    $region55: #{tpu_custom_call.1} parent=1 // pred_check_branch
      %430 = sbr.rel (0) target = $region57
    $region56: #{tpu_custom_call.1} parent=1 // pred_region
      %431 = dma.done [#allocation4], 128
    $region57: #{tpu_custom_call.1} parent=1 // pred_fallthru
      _
    %432 = vsyncpa [#allocation3], 1
    %433 = vsyncpa [#allocation6], 1
    %434 = vsyncpa [#allocation9], 1
    %435 = vsyncpa [#allocation4], 1

</llo_original>
